<compile_context>
chip_gen: v6e
topology: v6e:2x2x1
jax: 0.10.0
libtpu: 0.0.40
codegen_flags: <defaults>
</compile_context>

<pallas_src>
import functools

import jax
import jax.numpy as jnp
from jax import lax
from jax.experimental import pallas as pl
from jax.experimental.pallas import tpu as pltpu


def _sigmoid(x):
    # Numerically stable sigmoid; tanh runs on the EUP slot.
    return 0.5 * (jnp.tanh(0.5 * x) + 1.0)


def _spe_kernel(idx1_ref, idx2_ref, ncf_ref, sdae_ref, w_ref, b_ref,
                out_ref, m_ref, osum_ref, *, tb, n_items, batch, b_pad):
    p = pl.program_id(0)   # phase: 0 = accumulate o_sum over idx2, 1 = outputs
    j = pl.program_id(1)   # batch block

    # Once per call: per-item mixed table M and o_sum init.
    @pl.when((p == 0) & (j == 0))
    def _():
        e_ncf = ncf_ref[...].astype(jnp.float32)
        e_sdae = sdae_ref[...].astype(jnp.float32)
        # delta gate: sigmoid(<e_ncf, w> + b), VPU mul + lane reduce (no MXU).
        delta = _sigmoid(
            jnp.sum(e_ncf * w_ref[...], axis=-1, keepdims=True) + b_ref[0])
        m_ref[...] = e_ncf * (1.0 - delta) + e_sdae * delta        # (n_items, d)
        osum_ref[...] = jnp.zeros_like(osum_ref)

    # One-hot (items x batch-block); batch indices ride the lane axis.
    item_iota = lax.broadcasted_iota(jnp.int32, (n_items, tb), 0)

    @pl.when(p == 0)
    def _():
        onehot = (idx2_ref[...] == item_iota).astype(jnp.float32)  # (n_items, tb)
        if b_pad != batch:  # statically skipped when batch divides evenly
            pos = j * tb + lax.broadcasted_iota(jnp.int32, (1, tb), 1)
            onehot = jnp.where(pos < batch, onehot, 0.0)
        counts = jnp.sum(onehot, axis=1, keepdims=True)            # (n_items, 1)
        # o_sum += sum_item counts[item] * M[item, :]
        osum_ref[...] += jnp.sum(counts * m_ref[...], axis=0, keepdims=True)

    @pl.when(p == 1)
    def _():
        # s[item] = M[item, :] . o_sum ; out_r = sigmoid(s[idx1_r]) via one-hot.
        s_col = jnp.sum(m_ref[...] * osum_ref[...], axis=1, keepdims=True)  # (n_items,1)
        onehot = (idx1_ref[...] == item_iota).astype(jnp.float32)           # (n_items,tb)
        dots = jnp.sum(s_col * onehot, axis=0, keepdims=True)               # (1, tb)
        out_ref[...] = _sigmoid(dots)                                       # lane-dense


def spe_forward(item_indices1, item_indices2, params, *, block_rows=1024):
    e_ncf = jnp.asarray(params["emb_ncf"], jnp.float32)
    e_sdae = jnp.asarray(params["emb_sdae"], jnp.float32)
    w = jnp.asarray(params["w_delta"], jnp.float32).reshape(1, -1)   # (1, D)
    b = jnp.asarray(params["b_delta"], jnp.float32).reshape(1)       # (1,) SMEM

    n_items, d = e_ncf.shape
    # The reference defines delta_fc with in_features=num_items and applies it
    # to latent_dim-sized embeddings, so num_items == latent_dim is required.
    assert w.shape[1] == d, "SPE reference requires num_items == latent_dim"

    batch = int(item_indices1.shape[0])
    if batch <= block_rows:
        tb = batch                    # single full-extent block
    else:
        assert block_rows % 128 == 0, "block_rows must be a multiple of 128"
        tb = block_rows
    nb = pl.cdiv(batch, tb)
    b_pad = nb * tb

    idx1 = jnp.asarray(item_indices1, jnp.int32).reshape(1, batch)
    idx2 = jnp.asarray(item_indices2, jnp.int32).reshape(1, batch)
    if b_pad != batch:
        pad = jnp.zeros((1, b_pad - batch), jnp.int32)   # index 0 => in-bounds dummy
        idx1 = jnp.concatenate([idx1, pad], axis=1)
        idx2 = jnp.concatenate([idx2, pad], axis=1)

    idx_spec = pl.BlockSpec((1, tb), lambda p, j: (0, j))            # lane-dense
    table_spec = pl.BlockSpec((n_items, d), lambda p, j: (0, 0))     # VMEM-resident
    w_spec = pl.BlockSpec((1, d), lambda p, j: (0, 0))
    b_spec = pl.BlockSpec(memory_space=pltpu.SMEM)
    out_spec = pl.BlockSpec((1, tb), lambda p, j: (0, j))            # lane-dense

    out_pad = pl.pallas_call(
        functools.partial(_spe_kernel, tb=tb, n_items=n_items,
                          batch=batch, b_pad=b_pad),
        out_shape=jax.ShapeDtypeStruct((1, b_pad), jnp.float32),
        grid_spec=pltpu.PrefetchScalarGridSpec(
            num_scalar_prefetch=0,
            grid=(2, nb),   # (phase, batch blocks); phase 0 fully precedes 1
            in_specs=[idx_spec, idx_spec, table_spec, table_spec, w_spec, b_spec],
            out_specs=out_spec,
            scratch_shapes=[pltpu.VMEM((n_items, d), jnp.float32),   # M table
                            pltpu.VMEM((1, d), jnp.float32)],        # o_sum acc
        ),
        compiler_params=pltpu.CompilerParams(
            # Phase axis and o_sum accumulation are sequential.
            dimension_semantics=("arbitrary", "arbitrary"),
            # Tables are tiny (num_items == latent_dim), but keep explicit
            # headroom; 32 MiB fits every generation incl. v7x's 64 MiB VMEM.
            vmem_limit_bytes=32 * 1024 * 1024),
    )(idx1, idx2, e_ncf, e_sdae, w, b)

    return out_pad.reshape(b_pad, 1)[:batch]


def spe_reference(item_indices1, item_indices2, params):
    """Pure-JAX reference matching the PyTorch forward (full f32 precision)."""
    e_ncf, e_sdae = params["emb_ncf"], params["emb_sdae"]
    w_delta, b_delta = params["w_delta"], params["b_delta"]
    hp = lax.Precision.HIGHEST
    e1n = e_ncf[item_indices1]
    e1s = e_sdae[item_indices1]
    e2n = e_ncf[item_indices2]
    e2s = e_sdae[item_indices2]
    d1 = jax.nn.sigmoid(jnp.dot(e1n, w_delta.T, precision=hp) + b_delta).reshape(-1, 1)
    d2 = jax.nn.sigmoid(jnp.dot(e2n, w_delta.T, precision=hp) + b_delta).reshape(-1, 1)
    t = e1n * (1.0 - d1) + e1s * d1
    o = e2n * (1.0 - d2) + e2s * d2
    dots = jnp.dot(t, o.T, precision=hp).sum(-1).reshape(-1, 1)
    return jax.nn.sigmoid(dots)


if __name__ == "__main__":
    # num_items == latent_dim so delta_fc(in=num_items) applies to latent_dim
    # embeddings, as the original forward implicitly requires.
    NUM_ITEMS = 32
    LATENT_DIM = 32
    BATCH = 8

    key = jax.random.PRNGKey(0)
    k1, k2, k3, k4, k5, k6, k7, k8 = jax.random.split(key, 8)

    params = {
        "emb_ncf": jax.random.normal(k1, (NUM_ITEMS, LATENT_DIM), jnp.float32) * 0.1,
        "emb_sdae": jax.random.normal(k2, (NUM_ITEMS, LATENT_DIM), jnp.float32) * 0.1,
        "w_delta": jax.random.normal(k3, (1, NUM_ITEMS), jnp.float32) * 0.1,
        "b_delta": jax.random.normal(k4, (1,), jnp.float32) * 0.1,
    }
    item_indices1 = jax.random.randint(k5, (BATCH,), 0, NUM_ITEMS)
    item_indices2 = jax.random.randint(k6, (BATCH,), 0, NUM_ITEMS)

    out = jax.block_until_ready(spe_forward(item_indices1, item_indices2, params))
    ref = jax.block_until_ready(spe_reference(item_indices1, item_indices2, params))
    assert out.shape == (BATCH, 1), out.shape
    assert jnp.allclose(out, ref, atol=1e-5, rtol=1e-5), (out, ref)

    # Secondary check: multi-block grid, padding + phase-0 masking exercised.
    B2 = 300
    idx1b = jax.random.randint(k7, (B2,), 0, NUM_ITEMS)
    idx2b = jax.random.randint(k8, (B2,), 0, NUM_ITEMS)
    out2 = jax.block_until_ready(spe_forward(idx1b, idx2b, params, block_rows=128))
    ref2 = jax.block_until_ready(spe_reference(idx1b, idx2b, params))
    assert out2.shape == (B2, 1), out2.shape
    assert jnp.allclose(out2, ref2, atol=1e-5, rtol=1e-5), (out2, ref2)

    print("KERNEL_OK")
</pallas_src>

<mosaic_0001>
module attributes {stable_mosaic.version = 11 : i64} {
  func.func @_spe_kernel(%arg0: i32, %arg1: i32, %arg2: memref<1x8xi32, #tpu.memory_space<vmem>>, %arg3: memref<1x8xi32, #tpu.memory_space<vmem>>, %arg4: memref<32x32xf32, #tpu.memory_space<vmem>>, %arg5: memref<32x32xf32, #tpu.memory_space<vmem>>, %arg6: memref<1x32xf32, #tpu.memory_space<vmem>>, %arg7: memref<1xf32, #tpu.memory_space<smem>>, %arg8: memref<1x8xf32, #tpu.memory_space<vmem>>, %arg9: memref<32x32xf32, #tpu.memory_space<vmem>>, %arg10: memref<1x32xf32, #tpu.memory_space<vmem>>) attributes {dimension_semantics = [#tpu.dimension_semantics<arbitrary>, #tpu.dimension_semantics<arbitrary>], iteration_bounds = array<i64: 2, 1>, scalar_prefetch = 0 : i64, scratch_operands = 2 : i64, tpu.core_type = #tpu.core_type<tc>, window_params = [{transform_indices = @transform_0, window_bounds = array<i64: 1, 8>}, {transform_indices = @transform_1, window_bounds = array<i64: 1, 8>}, {pipeline_mode = #tpu.pipeline_mode<synchronous>, transform_indices = @transform_2, window_bounds = array<i64: 32, 32>}, {pipeline_mode = #tpu.pipeline_mode<synchronous>, transform_indices = @transform_3, window_bounds = array<i64: 32, 32>}, {pipeline_mode = #tpu.pipeline_mode<synchronous>, transform_indices = @transform_4, window_bounds = array<i64: 1, 32>}, {transform_indices = @transform_5, window_bounds = array<i64: 1>}, {transform_indices = @transform_6, window_bounds = array<i64: 1, 8>}]} {
    %c0_i32 = arith.constant 0 : i32
    %0 = arith.cmpi eq, %arg0, %c0_i32 : i32
    %c0_i32_0 = arith.constant 0 : i32
    %1 = arith.cmpi eq, %arg1, %c0_i32_0 : i32
    %2 = arith.andi %0, %1 : i1
    %3 = arith.extui %2 : i1 to i32
    %c0_i32_1 = arith.constant 0 : i32
    %4 = arith.cmpi ne, %3, %c0_i32_1 : i32
    scf.if %4 {
      %c0 = arith.constant 0 : index
      %c0_5 = arith.constant 0 : index
      %12 = vector.load %arg4[%c0, %c0_5] : memref<32x32xf32, #tpu.memory_space<vmem>>, vector<32x32xf32>
      %c0_6 = arith.constant 0 : index
      %c0_7 = arith.constant 0 : index
      %13 = vector.load %arg5[%c0_6, %c0_7] : memref<32x32xf32, #tpu.memory_space<vmem>>, vector<32x32xf32>
      %c0_8 = arith.constant 0 : index
      %c0_9 = arith.constant 0 : index
      %14 = vector.load %arg6[%c0_8, %c0_9] : memref<1x32xf32, #tpu.memory_space<vmem>>, vector<1x32xf32>
      %15 = vector.broadcast %14 : vector<1x32xf32> to vector<32x32xf32>
      %16 = arith.mulf %12, %15 : vector<32x32xf32>
      %cst = arith.constant dense<0.000000e+00> : vector<32xf32>
      %17 = vector.multi_reduction <add>, %16, %cst [1] : vector<32x32xf32> to vector<32xf32>
      %18 = vector.shape_cast %17 : vector<32xf32> to vector<32x1xf32>
      %c0_10 = arith.constant 0 : index
      %19 = memref.load %arg7[%c0_10] : memref<1xf32, #tpu.memory_space<smem>>
      %20 = vector.broadcast %19 : f32 to vector<32x1xf32>
      %21 = arith.addf %18, %20 : vector<32x1xf32>
      %cst_11 = arith.constant 5.000000e-01 : f32
      %22 = vector.broadcast %cst_11 : f32 to vector<32x1xf32>
      %23 = arith.mulf %22, %21 : vector<32x1xf32>
      %24 = math.tanh %23 : vector<32x1xf32>
      %cst_12 = arith.constant 1.000000e+00 : f32
      %25 = vector.broadcast %cst_12 : f32 to vector<32x1xf32>
      %26 = arith.addf %24, %25 : vector<32x1xf32>
      %cst_13 = arith.constant 5.000000e-01 : f32
      %27 = vector.broadcast %cst_13 : f32 to vector<32x1xf32>
      %28 = arith.mulf %27, %26 : vector<32x1xf32>
      %cst_14 = arith.constant 1.000000e+00 : f32
      %29 = vector.broadcast %cst_14 : f32 to vector<32x1xf32>
      %30 = arith.subf %29, %28 : vector<32x1xf32>
      %31 = vector.broadcast %30 : vector<32x1xf32> to vector<32x32xf32>
      %32 = arith.mulf %12, %31 : vector<32x32xf32>
      %33 = vector.broadcast %28 : vector<32x1xf32> to vector<32x32xf32>
      %34 = arith.mulf %13, %33 : vector<32x32xf32>
      %35 = arith.addf %32, %34 : vector<32x32xf32>
      %c0_15 = arith.constant 0 : index
      %c0_16 = arith.constant 0 : index
      %36 = vector.load %arg9[%c0_15, %c0_16] : memref<32x32xf32, #tpu.memory_space<vmem>>, vector<32x32xf32>
      tpu.vector_store %arg9[%c0_15, %c0_16], %35 {strides = array<i32>} : memref<32x32xf32, #tpu.memory_space<vmem>>, vector<32x32xf32>,
      %cst_17 = arith.constant 0.000000e+00 : f32
      %37 = vector.broadcast %cst_17 : f32 to vector<1x32xf32>
      %c0_18 = arith.constant 0 : index
      %c0_19 = arith.constant 0 : index
      %38 = vector.load %arg10[%c0_18, %c0_19] : memref<1x32xf32, #tpu.memory_space<vmem>>, vector<1x32xf32>
      tpu.vector_store %arg10[%c0_18, %c0_19], %37 {strides = array<i32>} : memref<1x32xf32, #tpu.memory_space<vmem>>, vector<1x32xf32>,
    } else {
    }
    %5 = tpu.iota {dimensions = array<i32: 0>} : vector<32x8xi32>
    %c0_i32_2 = arith.constant 0 : i32
    %6 = arith.cmpi eq, %arg0, %c0_i32_2 : i32
    %7 = arith.extui %6 : i1 to i32
    %c0_i32_3 = arith.constant 0 : i32
    %8 = arith.cmpi ne, %7, %c0_i32_3 : i32
    scf.if %8 {
      %c0 = arith.constant 0 : index
      %c0_5 = arith.constant 0 : index
      %12 = vector.load %arg3[%c0, %c0_5] : memref<1x8xi32, #tpu.memory_space<vmem>>, vector<1x8xi32>
      %13 = vector.broadcast %12 : vector<1x8xi32> to vector<32x8xi32>
      %14 = arith.cmpi eq, %13, %5 : vector<32x8xi32>
      %15 = arith.extui %14 : vector<32x8xi1> to vector<32x8xi32>
      %16 = arith.sitofp %15 : vector<32x8xi32> to vector<32x8xf32>
      %cst = arith.constant dense<0.000000e+00> : vector<32xf32>
      %17 = vector.multi_reduction <add>, %16, %cst [1] : vector<32x8xf32> to vector<32xf32>
      %18 = vector.shape_cast %17 : vector<32xf32> to vector<32x1xf32>
      %c0_6 = arith.constant 0 : index
      %c0_7 = arith.constant 0 : index
      %19 = vector.load %arg10[%c0_6, %c0_7] : memref<1x32xf32, #tpu.memory_space<vmem>>, vector<1x32xf32>
      %c0_8 = arith.constant 0 : index
      %c0_9 = arith.constant 0 : index
      %20 = vector.load %arg9[%c0_8, %c0_9] : memref<32x32xf32, #tpu.memory_space<vmem>>, vector<32x32xf32>
      %21 = vector.broadcast %18 : vector<32x1xf32> to vector<32x32xf32>
      %22 = arith.mulf %21, %20 : vector<32x32xf32>
      %cst_10 = arith.constant dense<0.000000e+00> : vector<32xf32>
      %23 = vector.multi_reduction <add>, %22, %cst_10 [0] : vector<32x32xf32> to vector<32xf32>
      %24 = vector.shape_cast %23 : vector<32xf32> to vector<1x32xf32>
      %25 = arith.addf %19, %24 : vector<1x32xf32>
      %c0_11 = arith.constant 0 : index
      %c0_12 = arith.constant 0 : index
      %26 = vector.load %arg10[%c0_11, %c0_12] : memref<1x32xf32, #tpu.memory_space<vmem>>, vector<1x32xf32>
      tpu.vector_store %arg10[%c0_11, %c0_12], %25 {strides = array<i32>} : memref<1x32xf32, #tpu.memory_space<vmem>>, vector<1x32xf32>,
    } else {
    }
    %c1_i32 = arith.constant 1 : i32
    %9 = arith.cmpi eq, %arg0, %c1_i32 : i32
    %10 = arith.extui %9 : i1 to i32
    %c0_i32_4 = arith.constant 0 : i32
    %11 = arith.cmpi ne, %10, %c0_i32_4 : i32
    scf.if %11 {
      %c0 = arith.constant 0 : index
      %c0_5 = arith.constant 0 : index
      %12 = vector.load %arg9[%c0, %c0_5] : memref<32x32xf32, #tpu.memory_space<vmem>>, vector<32x32xf32>
      %c0_6 = arith.constant 0 : index
      %c0_7 = arith.constant 0 : index
      %13 = vector.load %arg10[%c0_6, %c0_7] : memref<1x32xf32, #tpu.memory_space<vmem>>, vector<1x32xf32>
      %14 = vector.broadcast %13 : vector<1x32xf32> to vector<32x32xf32>
      %15 = arith.mulf %12, %14 : vector<32x32xf32>
      %cst = arith.constant dense<0.000000e+00> : vector<32xf32>
      %16 = vector.multi_reduction <add>, %15, %cst [1] : vector<32x32xf32> to vector<32xf32>
      %17 = vector.shape_cast %16 : vector<32xf32> to vector<32x1xf32>
      %c0_8 = arith.constant 0 : index
      %c0_9 = arith.constant 0 : index
      %18 = vector.load %arg2[%c0_8, %c0_9] : memref<1x8xi32, #tpu.memory_space<vmem>>, vector<1x8xi32>
      %19 = vector.broadcast %18 : vector<1x8xi32> to vector<32x8xi32>
      %20 = arith.cmpi eq, %19, %5 : vector<32x8xi32>
      %21 = arith.extui %20 : vector<32x8xi1> to vector<32x8xi32>
      %22 = arith.sitofp %21 : vector<32x8xi32> to vector<32x8xf32>
      %23 = vector.broadcast %17 : vector<32x1xf32> to vector<32x8xf32>
      %24 = arith.mulf %23, %22 : vector<32x8xf32>
      %cst_10 = arith.constant dense<0.000000e+00> : vector<8xf32>
      %25 = vector.multi_reduction <add>, %24, %cst_10 [0] : vector<32x8xf32> to vector<8xf32>
      %26 = vector.shape_cast %25 : vector<8xf32> to vector<1x8xf32>
      %cst_11 = arith.constant 5.000000e-01 : f32
      %27 = vector.broadcast %cst_11 : f32 to vector<1x8xf32>
      %28 = arith.mulf %27, %26 : vector<1x8xf32>
      %29 = math.tanh %28 : vector<1x8xf32>
      %cst_12 = arith.constant 1.000000e+00 : f32
      %30 = vector.broadcast %cst_12 : f32 to vector<1x8xf32>
      %31 = arith.addf %29, %30 : vector<1x8xf32>
      %cst_13 = arith.constant 5.000000e-01 : f32
      %32 = vector.broadcast %cst_13 : f32 to vector<1x8xf32>
      %33 = arith.mulf %32, %31 : vector<1x8xf32>
      %c0_14 = arith.constant 0 : index
      %c0_15 = arith.constant 0 : index
      %34 = vector.load %arg8[%c0_14, %c0_15] : memref<1x8xf32, #tpu.memory_space<vmem>>, vector<1x8xf32>
      tpu.vector_store %arg8[%c0_14, %c0_15], %33 {strides = array<i32>} : memref<1x8xf32, #tpu.memory_space<vmem>>, vector<1x8xf32>,
    } else {
    }
    return
  }
  func.func @transform_0(%arg0: i32, %arg1: i32) -> (i32, i32) {
    %c0_i32 = arith.constant 0 : i32
    %c0_i32_0 = arith.constant 0 : i32
    return %c0_i32, %arg1 : i32, i32
  }
  func.func @transform_1(%arg0: i32, %arg1: i32) -> (i32, i32) {
    %c0_i32 = arith.constant 0 : i32
    %c0_i32_0 = arith.constant 0 : i32
    return %c0_i32, %arg1 : i32, i32
  }
  func.func @transform_2(%arg0: i32, %arg1: i32) -> (i32, i32) {
    %c0_i32 = arith.constant 0 : i32
    %c0_i32_0 = arith.constant 0 : i32
    %c0_i32_1 = arith.constant 0 : i32
    return %c0_i32, %c0_i32_0 : i32, i32
  }
  func.func @transform_3(%arg0: i32, %arg1: i32) -> (i32, i32) {
    %c0_i32 = arith.constant 0 : i32
    %c0_i32_0 = arith.constant 0 : i32
    %c0_i32_1 = arith.constant 0 : i32
    return %c0_i32, %c0_i32_0 : i32, i32
  }
  func.func @transform_4(%arg0: i32, %arg1: i32) -> (i32, i32) {
    %c0_i32 = arith.constant 0 : i32
    %c0_i32_0 = arith.constant 0 : i32
    %c0_i32_1 = arith.constant 0 : i32
    return %c0_i32, %c0_i32_0 : i32, i32
  }
  func.func @transform_5(%arg0: i32, %arg1: i32) -> i32 {
    %c0_i32 = arith.constant 0 : i32
    %c0_i32_0 = arith.constant 0 : i32
    return %c0_i32 : i32
  }
  func.func @transform_6(%arg0: i32, %arg1: i32) -> (i32, i32) {
    %c0_i32 = arith.constant 0 : i32
    %c0_i32_0 = arith.constant 0 : i32
    return %c0_i32, %arg1 : i32, i32
  }
}

</mosaic_0001>

<llo_original>
// kernel: tpu_custom_call.1
$region0: #{tpu_custom_call.1}
  #allocation0 [shape = 'u32[]', space=smem, size = 0x4, offset = 0x4, fixed_abs, tag = 'smem constant byte address 0x4 - core index']
  #allocation1 [shape = 'u32[144,128]{1,0:T(1,128)}', space=vmem, size = 0x12000, scoped, tag = 'internal scratch']
  #allocation2 [shape = 'f32[32,32]{1,0:T(8,128)}', space=vmem, size = 0x4000, scoped, tag = 'scratch operand']
  #allocation3 [shape = 'f32[1,32]{1,0:T(1,128)}', space=vmem, size = 0x200, scoped, tag = 'scratch operand']
  #allocation4 [shape = 'f32[1]{0:T(128)S(6)}', space=smem, size = 0x200, scoped, tag = 'scoped memory for tpu_custom_call.1']
  %s0 = inlined_call_operand.vmem [shape: s32[1,8], index: 0, kind: input, shape index: {}]
  %s1 = inlined_call_operand.vmem [shape: s32[1,8], index: 1, kind: input, shape index: {}]
  %s2 = inlined_call_operand.hbm [shape: f32[32,32], index: 2, kind: input, shape index: {}]
  %s3 = inlined_call_operand.hbm [shape: f32[32,32], index: 3, kind: input, shape index: {}]
  %s4 = inlined_call_operand.vmem [shape: f32[1,32], index: 4, kind: input, shape index: {}]
  %s5 = inlined_call_operand.<no memory space> [shape: f32[1], index: 5, kind: input, shape index: {}]
  %s6 = inlined_call_operand.hbm [shape: f32[1,8], index: 6, kind: output, shape index: {}]
  %s7 = sld [smem:[#allocation0]]
  $region77: #{tpu_custom_call.1} parent=0
    _
  %s9 = ssub.s32 1, %s7
  %s10 = scalar_select 0, %s9, %s7
  %11 = sst [smem:[#allocation4]] %s5
  $region1: #{tpu_custom_call.1} parent=0
    #allocation5 [shape = 'u8[16384]{0}', space=vmem, size = 0x4000, scoped, tag = 'input window, operand 2, single buffered']
    #allocation6 [shape = 's32[2]{0}', space=sflag, size = 0x8, scoped, tag = 'scoped memory for tpu_custom_call.1']
    #allocation7 [shape = 's32[2]{0}', space=sflag, size = 0x8, scoped, tag = 'scoped memory for tpu_custom_call.1']
    #allocation8 [shape = 'u8[16384]{0}', space=vmem, size = 0x4000, scoped, tag = 'input window, operand 3, single buffered']
    #allocation9 [shape = 's32[1]{0}', space=sflag, size = 0x4, scoped, tag = 'scoped memory for tpu_custom_call.1']
    #allocation10 [shape = 'u8[512]{0}', space=vmem, size = 0x400, scoped, tag = 'output window, operand 0, single buffered']
    %12 = vsyncpa [#allocation6], 0
    %13 = vsyncpa [#allocation9], 0
    %14 = vsyncpa [#allocation7], 0
    loop: start=0, step=1, limit=4
    $region2: #{tpu_custom_call.1} parent=1 // loop_pre_header
      _
    $region3: #{tpu_custom_call.1} parent=1 // loop_header
      %s16 = sphi 0, %s20
      %p17 = scmp.ge.s32.totalorder %s16, 4
      %s23 = sphi 0, %s35
      %s24 = sphi 0, %s31
      %s25 = sphi 0, %s23
      %s26 = sphi 0, %s24
      %s27 = sphi 0, %s25
      %s28 = sphi 0, %s26
      %s38 = sphi 0, %s40
      %s41 = sphi 0, %s38
      %s42 = sphi 0, %s41
      %s58 = sphi 0, %s42
      %s64 = sphi 0, %s66
      %s67 = sphi 0, %s64
      %s68 = sphi 0, %s67
      %s84 = sphi 0, %s68
      %s88 = sphi 0, %s88
      %s90 = sphi 0, %s88
      %s91 = sphi 0, %s90
      %s105 = sphi 0, %s91
      %s109 = sphi 0, %s109
      %s111 = sphi 0, %s109
      %s112 = sphi 0, %s111
      %s126 = sphi 0, %s112
      %s130 = sphi 0, %s130
      %s132 = sphi 0, %s130
      %s133 = sphi 0, %s132
      %s147 = sphi 0, %s133
      %s151 = sphi 0, %s151
      %s153 = sphi 0, %s151
      %s154 = sphi 0, %s153
      %s168 = sphi 0, %s154
      %s174 = sphi 0, %s176
      %s177 = sphi 0, %s174
      %s178 = sphi 0, %s177
      %s194 = sphi 0, %s178
    $region4: #{tpu_custom_call.1} parent=1 // loop_header_branch
      %19 = sbr.rel (%p17) target = $region8
    $region5: #{tpu_custom_call.1} parent=1 // loop_body
      %s21 = ssub.s32 %s16, 1
      %s22 = ssub.s32 %s16, 2
      %s29 = sadd.s32 1, %s24
      %p30 = scmp.ge.s32.totalorder %s29, 1
      %s31 = scalar_select %p30, 0, %s29
      %s32 = sadd.s32 1, %s23
      %s33 = scalar_select %p30, %s32, %s23
      %p34 = scmp.ge.s32.totalorder %s33, 2
      %s35 = scalar_select %p34, 0, %s33
      %s36 = ssub.s32 %s24, %s31
      %p37 = scmp.eq.s32.totalorder %s36, 0
      %s39 = sadd.s32 %s38, 1
      %s40 = scalar_select %p37, %s38, %s39
      %p43 = pneg %p37
      %p44 = scmp.eq.s32.totalorder %s16, 1
      %p45 = por %p43, %p44
      %p46 = scmp.ne.s32.totalorder %s38, %s41
      %p47 = scmp.eq.s32.totalorder %s16, 0
      %p48 = por %p46, %p47
      %p49 = scmp.ne.s32.totalorder %s38, %s41
      %p50 = scmp.eq.s32.totalorder %s21, 1
      %p51 = por %p49, %p50
      %p52 = scmp.ne.s32.totalorder %s41, %s42
      %p53 = scmp.eq.s32.totalorder %s21, 0
      %p54 = por %p52, %p53
      %p55 = scmp.ne.s32.totalorder %s41, %s42
      %p56 = scmp.eq.s32.totalorder %s22, 1
      %p57 = por %p55, %p56
      %p59 = scmp.ne.s32.totalorder %s42, %s58
      %p60 = scmp.eq.s32.totalorder %s22, 0
      %p61 = por %p59, %p60
      %s62 = ssub.s32 %s24, %s31
      %p63 = scmp.eq.s32.totalorder %s62, 0
      %s65 = sadd.s32 %s64, 1
      %s66 = scalar_select %p63, %s64, %s65
      %p69 = pneg %p63
      %p70 = scmp.eq.s32.totalorder %s16, 1
      %p71 = por %p69, %p70
      %p72 = scmp.ne.s32.totalorder %s64, %s67
      %p73 = scmp.eq.s32.totalorder %s16, 0
      %p74 = por %p72, %p73
      %p75 = scmp.ne.s32.totalorder %s64, %s67
      %p76 = scmp.eq.s32.totalorder %s21, 1
      %p77 = por %p75, %p76
      %p78 = scmp.ne.s32.totalorder %s67, %s68
      %p79 = scmp.eq.s32.totalorder %s21, 0
      %p80 = por %p78, %p79
      %p81 = scmp.ne.s32.totalorder %s67, %s68
      %p82 = scmp.eq.s32.totalorder %s22, 1
      %p83 = por %p81, %p82
      %p85 = scmp.ne.s32.totalorder %s68, %s84
      %p86 = scmp.eq.s32.totalorder %s22, 0
      %p87 = por %p85, %p86
      %s89 = sadd.s32 %s88, 1
      %p92 = scmp.eq.s32.totalorder %s16, 1
      %p93 = scmp.ne.s32.totalorder %s88, %s90
      %p94 = scmp.eq.s32.totalorder %s16, 0
      %p95 = por %p93, %p94
      %p96 = scmp.ne.s32.totalorder %s88, %s90
      %p97 = scmp.eq.s32.totalorder %s21, 1
      %p98 = por %p96, %p97
      %p99 = scmp.ne.s32.totalorder %s90, %s91
      %p100 = scmp.eq.s32.totalorder %s21, 0
      %p101 = por %p99, %p100
      %p102 = scmp.ne.s32.totalorder %s90, %s91
      %p103 = scmp.eq.s32.totalorder %s22, 1
      %p104 = por %p102, %p103
      %p106 = scmp.ne.s32.totalorder %s91, %s105
      %p107 = scmp.eq.s32.totalorder %s22, 0
      %p108 = por %p106, %p107
      %s110 = sadd.s32 %s109, 1
      %p113 = scmp.eq.s32.totalorder %s16, 1
      %p114 = scmp.ne.s32.totalorder %s109, %s111
      %p115 = scmp.eq.s32.totalorder %s16, 0
      %p116 = por %p114, %p115
      %p117 = scmp.ne.s32.totalorder %s109, %s111
      %p118 = scmp.eq.s32.totalorder %s21, 1
      %p119 = por %p117, %p118
      %p120 = scmp.ne.s32.totalorder %s111, %s112
      %p121 = scmp.eq.s32.totalorder %s21, 0
      %p122 = por %p120, %p121
      %p123 = scmp.ne.s32.totalorder %s111, %s112
      %p124 = scmp.eq.s32.totalorder %s22, 1
      %p125 = por %p123, %p124
      %p127 = scmp.ne.s32.totalorder %s112, %s126
      %p128 = scmp.eq.s32.totalorder %s22, 0
      %p129 = por %p127, %p128
      %s131 = sadd.s32 %s130, 1
      %p134 = scmp.eq.s32.totalorder %s16, 1
      %p135 = scmp.ne.s32.totalorder %s130, %s132
      %p136 = scmp.eq.s32.totalorder %s16, 0
      %p137 = por %p135, %p136
      %p138 = scmp.ne.s32.totalorder %s130, %s132
      %p139 = scmp.eq.s32.totalorder %s21, 1
      %p140 = por %p138, %p139
      %p141 = scmp.ne.s32.totalorder %s132, %s133
      %p142 = scmp.eq.s32.totalorder %s21, 0
      %p143 = por %p141, %p142
      %p144 = scmp.ne.s32.totalorder %s132, %s133
      %p145 = scmp.eq.s32.totalorder %s22, 1
      %p146 = por %p144, %p145
      %p148 = scmp.ne.s32.totalorder %s133, %s147
      %p149 = scmp.eq.s32.totalorder %s22, 0
      %p150 = por %p148, %p149
      %s152 = sadd.s32 %s151, 1
      %p155 = scmp.eq.s32.totalorder %s16, 1
      %p156 = scmp.ne.s32.totalorder %s151, %s153
      %p157 = scmp.eq.s32.totalorder %s16, 0
      %p158 = por %p156, %p157
      %p159 = scmp.ne.s32.totalorder %s151, %s153
      %p160 = scmp.eq.s32.totalorder %s21, 1
      %p161 = por %p159, %p160
      %p162 = scmp.ne.s32.totalorder %s153, %s154
      %p163 = scmp.eq.s32.totalorder %s21, 0
      %p164 = por %p162, %p163
      %p165 = scmp.ne.s32.totalorder %s153, %s154
      %p166 = scmp.eq.s32.totalorder %s22, 1
      %p167 = por %p165, %p166
      %p169 = scmp.ne.s32.totalorder %s154, %s168
      %p170 = scmp.eq.s32.totalorder %s22, 0
      %p171 = por %p169, %p170
      %s172 = ssub.s32 %s24, %s31
      %p173 = scmp.eq.s32.totalorder %s172, 0
      %s175 = sadd.s32 %s174, 1
      %s176 = scalar_select %p173, %s174, %s175
      %p179 = pneg %p173
      %p180 = scmp.eq.s32.totalorder %s16, 1
      %p181 = por %p179, %p180
      %p182 = scmp.ne.s32.totalorder %s174, %s177
      %p183 = scmp.eq.s32.totalorder %s16, 0
      %p184 = por %p182, %p183
      %p185 = scmp.ne.s32.totalorder %s174, %s177
      %p186 = scmp.eq.s32.totalorder %s21, 1
      %p187 = por %p185, %p186
      %p188 = scmp.ne.s32.totalorder %s177, %s178
      %p189 = scmp.eq.s32.totalorder %s21, 0
      %p190 = por %p188, %p189
      %p191 = scmp.ne.s32.totalorder %s177, %s178
      %p192 = scmp.eq.s32.totalorder %s22, 1
      %p193 = por %p191, %p192
      %p195 = scmp.ne.s32.totalorder %s178, %s194
      %p196 = scmp.eq.s32.totalorder %s22, 0
      %p197 = por %p195, %p196
      %p198 = scmp.le.s32.totalorder 1, %s16
      %p199 = scmp.lt.s32.totalorder %s16, 3
      %p200 = pnand %p198, %p199
      %p201 = pneg %p200
      // Predicated region
      $region9: #{tpu_custom_call.1} parent=5 // pred_check
        _
      $region10: #{tpu_custom_call.1} parent=5 // pred_check_branch
        %203 = sbr.rel (%p200) target = $region12
      $region11: #{tpu_custom_call.1} parent=5 // pred_region
        %s204 = ssub.s32 %s16, 1
        // Predicated region
        $region13: #{tpu_custom_call.1} parent=11 // pred_check
          %p205 = pneg %p54
        $region14: #{tpu_custom_call.1} parent=11 // pred_check_branch
          %207 = sbr.rel (%p205) target = $region16
        $region15: #{tpu_custom_call.1} parent=11 // pred_region
          %p208 = scmp.lt.s32.totalorder %s26, 0
          %s209 = scalar_select %p208, %s26, 0
          %s210 = scalar_lea.vmem %s0, %s209
        $region16: #{tpu_custom_call.1} parent=11 // pred_fallthru
          _
        // Predicated region
        $region17: #{tpu_custom_call.1} parent=11 // pred_check
          %p211 = pneg %p80
        $region18: #{tpu_custom_call.1} parent=11 // pred_check_branch
          %213 = sbr.rel (%p211) target = $region20
        $region19: #{tpu_custom_call.1} parent=11 // pred_region
          %p214 = scmp.lt.s32.totalorder %s26, 0
          %s215 = scalar_select %p214, %s26, 0
          %s216 = scalar_lea.vmem %s1, %s215
        $region20: #{tpu_custom_call.1} parent=11 // pred_fallthru
          _
        // Predicated region
        $region21: #{tpu_custom_call.1} parent=11 // pred_check
          %p217 = pneg %p101
        $region22: #{tpu_custom_call.1} parent=11 // pred_check_branch
          %219 = sbr.rel (%p217) target = $region24
        $region23: #{tpu_custom_call.1} parent=11 // pred_region
          %s221 = ssub.s32 512, 512
          %222 = vsyncadd [#allocation6], %s221
          %s223 = sshll.u32 [#allocation5], 4
          %s224 = int_to_ptr.vmem [resolvable:$true] %s223
          %229 = dma.hbm_to_vmem [thread:$0]  %s2, 512, %s224, [#allocation6], 128, 128, 8
        $region24: #{tpu_custom_call.1} parent=11 // pred_fallthru
          _
        // Predicated region
        $region25: #{tpu_custom_call.1} parent=11 // pred_check
          %p230 = pneg %p122
        $region26: #{tpu_custom_call.1} parent=11 // pred_check_branch
          %232 = sbr.rel (%p230) target = $region28
        $region27: #{tpu_custom_call.1} parent=11 // pred_region
          %s234 = ssub.s32 512, 512
          %235 = vsyncadd [#allocation9], %s234
          %s236 = sshll.u32 [#allocation8], 4
          %s237 = int_to_ptr.vmem [resolvable:$true] %s236
          %242 = dma.hbm_to_vmem [thread:$0]  %s3, 512, %s237, [#allocation9], 128, 128, 8
        $region28: #{tpu_custom_call.1} parent=11 // pred_fallthru
          _
        // Predicated region
        $region29: #{tpu_custom_call.1} parent=11 // pred_check
          %p243 = pneg %p143
        $region30: #{tpu_custom_call.1} parent=11 // pred_check_branch
          %245 = sbr.rel (%p243) target = $region32
        $region31: #{tpu_custom_call.1} parent=11 // pred_region
          _
        $region32: #{tpu_custom_call.1} parent=11 // pred_fallthru
          _
        // Predicated region
        $region33: #{tpu_custom_call.1} parent=11 // pred_check
          %p246 = pneg %p164
        $region34: #{tpu_custom_call.1} parent=11 // pred_check_branch
          %248 = sbr.rel (%p246) target = $region36
        $region35: #{tpu_custom_call.1} parent=11 // pred_region
          _
        $region36: #{tpu_custom_call.1} parent=11 // pred_fallthru
          _
      $region12: #{tpu_custom_call.1} parent=5 // pred_fallthru
        _
      %p249 = scmp.lt.s32.totalorder %s16, 2
      // Predicated region
      $region37: #{tpu_custom_call.1} parent=5 // pred_check
        %p250 = pneg %p249
      $region38: #{tpu_custom_call.1} parent=5 // pred_check_branch
        %252 = sbr.rel (%p250) target = $region40
      $region39: #{tpu_custom_call.1} parent=5 // pred_region
        _
      $region40: #{tpu_custom_call.1} parent=5 // pred_fallthru
        _
      %p253 = scmp.le.s32.totalorder 1, %s16
      %p254 = scmp.lt.s32.totalorder %s16, 3
      %p255 = pnand %p253, %p254
      %p256 = pneg %p255
      // Predicated region
      $region41: #{tpu_custom_call.1} parent=5 // pred_check
        _
      $region42: #{tpu_custom_call.1} parent=5 // pred_check_branch
        %258 = sbr.rel (%p255) target = $region44
      $region43: #{tpu_custom_call.1} parent=5 // pred_region
        %s259 = ssub.s32 %s16, 1
        // Predicated region
        $region45: #{tpu_custom_call.1} parent=43 // pred_check
          %p260 = pneg %p101
        $region46: #{tpu_custom_call.1} parent=43 // pred_check_branch
          %262 = sbr.rel (%p260) target = $region48
        $region47: #{tpu_custom_call.1} parent=43 // pred_region
          %263 = dma.done [#allocation6], 512
        $region48: #{tpu_custom_call.1} parent=43 // pred_fallthru
          _
        // Predicated region
        $region49: #{tpu_custom_call.1} parent=43 // pred_check
          %p264 = pneg %p122
        $region50: #{tpu_custom_call.1} parent=43 // pred_check_branch
          %266 = sbr.rel (%p264) target = $region52
        $region51: #{tpu_custom_call.1} parent=43 // pred_region
          %267 = dma.done [#allocation9], 512
        $region52: #{tpu_custom_call.1} parent=43 // pred_fallthru
          _
        %p268 = scmp.lt.s32.totalorder %s26, 0
        %s269 = scalar_select %p268, %s26, 0
        %s270 = scalar_lea.vmem %s0, %s269
        %p271 = pneg %p54
        %p272 = pneg %p51
        %p273 = scmp.lt.s32.totalorder %s26, 0
        %s274 = scalar_select %p273, %s26, 0
        %s275 = scalar_lea.vmem %s1, %s274
        %p276 = pneg %p80
        %p277 = pneg %p77
        %p278 = pneg %p101
        %p279 = pneg %p98
        %p280 = pneg %p122
        %p281 = pneg %p119
        %p282 = pneg %p143
        %p283 = pneg %p140
        %p284 = pneg %p164
        %p285 = pneg %p161
        %p286 = pneg %p190
        %p287 = pneg %p187
        %p288 = scmp.lt.s32.totalorder %s26, 0
        %s289 = scalar_select %p288, %s26, 0
        %s290 = scalar_lea.vmem %s0, %s289
        %p291 = scmp.lt.s32.totalorder %s26, 0
        %s292 = scalar_select %p291, %s26, 0
        %s293 = scalar_lea.vmem %s1, %s292
        %p294 = scmp.eq.s32.totalorder %s25, 0
        %p295 = scmp.eq.s32.totalorder %s26, 0
        %p296 = pnand %p294, %p295
        %p297 = pneg %p296
        // Predicated region
        $region53: #{tpu_custom_call.1} parent=43 // pred_check
          _
        $region54: #{tpu_custom_call.1} parent=43 // pred_check_branch
          %299 = sbr.rel (%p296) target = $region56
        $region55: #{tpu_custom_call.1} parent=43 // pred_region
          %v300 = vld [vmem:[#allocation5] sm:$0xff]
          %v301 = vld [vmem:[#allocation5 + $0x8] sm:$0xff]
          %v302 = vld [vmem:[#allocation5 + $0x10] sm:$0xff]
          %v303 = vld [vmem:[#allocation5 + $0x18] sm:$0xff]
          %v304 = vld [vmem:[#allocation8] sm:$0xff]
          %v305 = vld [vmem:[#allocation8 + $0x8] sm:$0xff]
          %v306 = vld [vmem:[#allocation8 + $0x10] sm:$0xff]
          %v307 = vld [vmem:[#allocation8 + $0x18] sm:$0xff]
          %v308 = vld [vmem:[%s4] sm:$0x1]
          %v310 = vlaneseq
          %v311 = vshrl.u32 %v310, 7
          %v312 = vsub.s32 0, %v311
          %v313 = vrot.slane %v308, %v312
          %v315 = vmul.f32 %v300, %v313
          %v316 = vmul.f32 %v301, %v313
          %v317 = vmul.f32 %v302, %v313
          %v318 = vmul.f32 %v303, %v313
          %vm319 = vcmask 261120
          %v320 = vsel %vm319, %v315, 0.0
          %321 = vadd.xlane.f32.xlu0 %v320
          %v322 = vpop.xlane.xlu0 %321
          %v323 = vsel %vm319, %v316, 0.0
          %324 = vadd.xlane.f32.xlu0 %v323
          %v325 = vpop.xlane.xlu0 %324
          %v326 = vsel %vm319, %v317, 0.0
          %327 = vadd.xlane.f32.xlu0 %v326
          %v328 = vpop.xlane.xlu0 %327
          %v329 = vsel %vm319, %v318, 0.0
          %330 = vadd.xlane.f32.xlu0 %v329
          %v331 = vpop.xlane.xlu0 %330
          %s332 = sld [smem:[#allocation4]]
          %v333 = vstv %s332
          %v334 = vadd.f32 %v322, %v333
          %v335 = vadd.f32 %v325, %v333
          %v336 = vadd.f32 %v328, %v333
          %v337 = vadd.f32 %v331, %v333
          %v338 = vmul.f32 %v334, 0.5
          %v339 = vmul.f32 %v335, 0.5
          %v340 = vmul.f32 %v336, 0.5
          %v341 = vmul.f32 %v337, 0.5
          %v342 = vtanh.pop %v338
          %v343 = vtanh.pop %v339
          %v344 = vtanh.pop %v340
          %v345 = vtanh.pop %v341
          %v346 = vadd.f32 %v342, 1.0
          %v347 = vadd.f32 %v343, 1.0
          %v348 = vadd.f32 %v344, 1.0
          %v349 = vadd.f32 %v345, 1.0
          %v350 = vmul.f32 %v346, 0.5
          %v351 = vmul.f32 %v347, 0.5
          %v352 = vmul.f32 %v348, 0.5
          %v353 = vmul.f32 %v349, 0.5
          %v354 = vsub.f32 1.0, %v350
          %v355 = vsub.f32 1.0, %v351
          %v356 = vsub.f32 1.0, %v352
          %v357 = vsub.f32 1.0, %v353
          %v358 = vmul.f32 %v300, %v354
          %v359 = vmul.f32 %v301, %v355
          %v360 = vmul.f32 %v302, %v356
          %v361 = vmul.f32 %v303, %v357
          %v362 = vmul.f32 %v304, %v350
          %v363 = vmul.f32 %v305, %v351
          %v364 = vmul.f32 %v306, %v352
          %v365 = vmul.f32 %v307, %v353
          %v366 = vadd.f32 %v358, %v362
          %v367 = vadd.f32 %v359, %v363
          %v368 = vadd.f32 %v360, %v364
          %v369 = vadd.f32 %v361, %v365
          %370 = vst.msk [vmem:[#allocation2] sm:$0xff] %vm319, %v366
          %371 = vst.msk [vmem:[#allocation2 + $0x8] sm:$0xff] %vm319, %v367
          %372 = vst.msk [vmem:[#allocation2 + $0x10] sm:$0xff] %vm319, %v368
          %373 = vst.msk [vmem:[#allocation2 + $0x18] sm:$0xff] %vm319, %v369
          %vm374 = vcmask 253952
          %375 = vst.msk [vmem:[#allocation3] sm:$0x1] %vm374, 0.0
        $region56: #{tpu_custom_call.1} parent=43 // pred_fallthru
          _
        %v376 = vlaneseq
        %v377 = vshrl.u32 %v376, 7
        %v378 = vadd.s32 %v377, 8
        %v379 = vadd.s32 %v377, 16
        %v380 = vadd.s32 %v377, 24
        // Predicated region
        $region57: #{tpu_custom_call.1} parent=43 // pred_check
          %p381 = pneg %p294
        $region58: #{tpu_custom_call.1} parent=43 // pred_check_branch
          %383 = sbr.rel (%p381) target = $region60
        $region59: #{tpu_custom_call.1} parent=43 // pred_region
          %v384 = vld [vmem:[%s293] sm:$0x1]
          %v385 = vlaneseq
          %v386 = vshrl.u32 %v385, 7
          %v387 = vsub.s32 0, %v386
          %v388 = vrot.slane %v384, %v387
          %vm389 = vcmp.eq.s32.totalorder %v388, %v377
          %vm390 = vcmp.eq.s32.totalorder %v388, %v378
          %vm391 = vcmp.eq.s32.totalorder %v388, %v379
          %vm392 = vcmp.eq.s32.totalorder %v388, %v380
          %v393 = vsel %vm389, 1, 0
          %v394 = vsel %vm390, 1, 0
          %v395 = vsel %vm391, 1, 0
          %v396 = vsel %vm392, 1, 0
          %v397 = vcvt.s32.f32 %v393
          %v398 = vcvt.s32.f32 %v394
          %v399 = vcvt.s32.f32 %v395
          %v400 = vcvt.s32.f32 %v396
          %vm401 = vcmask 64512
          %v402 = vsel %vm401, %v397, 0.0
          %403 = vadd.xlane.f32.xlu0 %v402
          %v404 = vpop.xlane.xlu0 %403
          %v405 = vsel %vm401, %v398, 0.0
          %406 = vadd.xlane.f32.xlu0 %v405
          %v407 = vpop.xlane.xlu0 %406
          %v408 = vsel %vm401, %v399, 0.0
          %409 = vadd.xlane.f32.xlu0 %v408
          %v410 = vpop.xlane.xlu0 %409
          %v411 = vsel %vm401, %v400, 0.0
          %412 = vadd.xlane.f32.xlu0 %v411
          %v413 = vpop.xlane.xlu0 %412
          %v414 = vld [vmem:[#allocation3] sm:$0x1]
          %v415 = vld [vmem:[#allocation2] sm:$0xff]
          %v416 = vld [vmem:[#allocation2 + $0x8] sm:$0xff]
          %v417 = vld [vmem:[#allocation2 + $0x10] sm:$0xff]
          %v418 = vld [vmem:[#allocation2 + $0x18] sm:$0xff]
          %v419 = vmul.f32 %v404, %v415
          %v420 = vmul.f32 %v407, %v416
          %v421 = vmul.f32 %v410, %v417
          %v422 = vmul.f32 %v413, %v418
          %vm423 = vcmask 261120
          %v424 = vsel %vm423, %v419, 0.0
          %v425 = vsel %vm423, %v420, 0.0
          %v426 = vadd.f32 %v424, %v425
          %v427 = vsel %vm423, %v421, 0.0
          %v428 = vadd.f32 %v426, %v427
          %v429 = vsel %vm423, %v422, 0.0
          %v430 = vadd.f32 %v428, %v429
          %v431 = vrot.slane %v430, 4
          %v432 = vadd.f32 %v430, %v431
          %v433 = vrot.slane %v432, 2
          %v434 = vadd.f32 %v432, %v433
          %v435 = vrot.slane %v434, 1
          %v436 = vadd.f32 %v434, %v435
          %v437 = vadd.f32 %v414, %v436
          %vm438 = vcmask 253952
          %439 = vst.msk [vmem:[#allocation3] sm:$0x1] %vm438, %v437
        $region60: #{tpu_custom_call.1} parent=43 // pred_fallthru
          _
        %p440 = scmp.eq.s32.totalorder %s25, 1
        // Predicated region
        $region61: #{tpu_custom_call.1} parent=43 // pred_check
          %p441 = pneg %p440
        $region62: #{tpu_custom_call.1} parent=43 // pred_check_branch
          %443 = sbr.rel (%p441) target = $region64
        $region63: #{tpu_custom_call.1} parent=43 // pred_region
          %v444 = vld [vmem:[#allocation2] sm:$0xff]
          %v445 = vld [vmem:[#allocation2 + $0x8] sm:$0xff]
          %v446 = vld [vmem:[#allocation2 + $0x10] sm:$0xff]
          %v447 = vld [vmem:[#allocation2 + $0x18] sm:$0xff]
          %v448 = vld [vmem:[#allocation3] sm:$0x1]
          %v450 = vlaneseq
          %v451 = vshrl.u32 %v450, 7
          %v452 = vsub.s32 0, %v451
          %v453 = vrot.slane %v448, %v452
          %v455 = vmul.f32 %v444, %v453
          %v456 = vmul.f32 %v445, %v453
          %v457 = vmul.f32 %v446, %v453
          %v458 = vmul.f32 %v447, %v453
          %vm459 = vcmask 261120
          %v460 = vsel %vm459, %v455, 0.0
          %461 = vadd.xlane.f32.xlu0 %v460
          %v462 = vpop.xlane.xlu0 %461
          %v463 = vsel %vm459, %v456, 0.0
          %464 = vadd.xlane.f32.xlu0 %v463
          %v465 = vpop.xlane.xlu0 %464
          %v466 = vsel %vm459, %v457, 0.0
          %467 = vadd.xlane.f32.xlu0 %v466
          %v468 = vpop.xlane.xlu0 %467
          %v469 = vsel %vm459, %v458, 0.0
          %470 = vadd.xlane.f32.xlu0 %v469
          %v471 = vpop.xlane.xlu0 %470
          %v472 = vld [vmem:[%s290] sm:$0x1]
          %v473 = vlaneseq
          %v474 = vshrl.u32 %v473, 7
          %v475 = vsub.s32 0, %v474
          %v476 = vrot.slane %v472, %v475
          %vm477 = vcmp.eq.s32.totalorder %v476, %v377
          %vm478 = vcmp.eq.s32.totalorder %v476, %v378
          %vm479 = vcmp.eq.s32.totalorder %v476, %v379
          %vm480 = vcmp.eq.s32.totalorder %v476, %v380
          %v481 = vsel %vm477, 1, 0
          %v482 = vsel %vm478, 1, 0
          %v483 = vsel %vm479, 1, 0
          %v484 = vsel %vm480, 1, 0
          %v485 = vcvt.s32.f32 %v481
          %v486 = vcvt.s32.f32 %v482
          %v487 = vcvt.s32.f32 %v483
          %v488 = vcvt.s32.f32 %v484
          %v489 = vmul.f32 %v462, %v485
          %v490 = vmul.f32 %v465, %v486
          %v491 = vmul.f32 %v468, %v487
          %v492 = vmul.f32 %v471, %v488
          %vm493 = vcmask 64512
          %v494 = vsel %vm493, %v489, 0.0
          %v495 = vsel %vm493, %v490, 0.0
          %v496 = vadd.f32 %v494, %v495
          %v497 = vsel %vm493, %v491, 0.0
          %v498 = vadd.f32 %v496, %v497
          %v499 = vsel %vm493, %v492, 0.0
          %v500 = vadd.f32 %v498, %v499
          %v501 = vrot.slane %v500, 4
          %v502 = vadd.f32 %v500, %v501
          %v503 = vrot.slane %v502, 2
          %v504 = vadd.f32 %v502, %v503
          %v505 = vrot.slane %v504, 1
          %v506 = vadd.f32 %v504, %v505
          %v507 = vmul.f32 %v506, 0.5
          %v508 = vtanh.pop %v507
          %v509 = vadd.f32 %v508, 1.0
          %v510 = vmul.f32 %v509, 0.5
          %vm511 = vcmask 57344
          %512 = vst.msk [vmem:[#allocation10] sm:$0x1] %vm511, %v510
        $region64: #{tpu_custom_call.1} parent=43 // pred_fallthru
          _
        // Predicated region
        $region65: #{tpu_custom_call.1} parent=43 // pred_check
          %p513 = pneg %p187
        $region66: #{tpu_custom_call.1} parent=43 // pred_check_branch
          %515 = sbr.rel (%p513) target = $region68
        $region67: #{tpu_custom_call.1} parent=43 // pred_region
          %s517 = ssub.s32 16, 16
          %518 = vsyncadd [#allocation7], %s517
          %s519 = smul.addr %s26, 16
          %s520 = scalar_lea.hbm %s6, %s519
          %s522 = sshll.u32 [#allocation10], 4
          %s523 = int_to_ptr.vmem [resolvable:$true] %s522
          %525 = dma.vmem_to_hbm [thread:$0]  %s523, 16, %s520, [#allocation7]
        $region68: #{tpu_custom_call.1} parent=43 // pred_fallthru
          _
        // Predicated region
        $region69: #{tpu_custom_call.1} parent=43 // pred_check
          %p526 = pneg %p187
        $region70: #{tpu_custom_call.1} parent=43 // pred_check_branch
          %528 = sbr.rel (%p526) target = $region72
        $region71: #{tpu_custom_call.1} parent=43 // pred_region
          %529 = dma.done [#allocation7], 16
        $region72: #{tpu_custom_call.1} parent=43 // pred_fallthru
          _
      $region44: #{tpu_custom_call.1} parent=5 // pred_fallthru
        _
      %p530 = scmp.le.s32.totalorder 2, %s16
      // Predicated region
      $region73: #{tpu_custom_call.1} parent=5 // pred_check
        %p531 = pneg %p530
      $region74: #{tpu_custom_call.1} parent=5 // pred_check_branch
        %533 = sbr.rel (%p531) target = $region76
      $region75: #{tpu_custom_call.1} parent=5 // pred_region
        %s534 = ssub.s32 %s16, 2
      $region76: #{tpu_custom_call.1} parent=5 // pred_fallthru
        _
    $region6: #{tpu_custom_call.1} parent=1 // loop_footer
      %s20 = sadd.s32 1, %s16
    $region7: #{tpu_custom_call.1} parent=1 // loop_footer_branch
      %15 = sbr.rel target = $region3
    $region8: #{tpu_custom_call.1} parent=1 // loop_exit
      _
    %535 = vsyncpa [#allocation6], 1
    %s536 = scalar_lea.sflag [#allocation6], 1
    %537 = vsyncpa %s536, 1
    %538 = vsyncpa [#allocation9], 1
    %539 = vsyncpa [#allocation7], 1
    %s540 = scalar_lea.sflag [#allocation7], 1
    %541 = vsyncpa %s540, 1

</llo_original>
